<compile_context>
chip_gen: v5e
topology: v5e:2x2
jax: 0.10.0
libtpu: 0.0.40
codegen_flags: <defaults>
</compile_context>

<pallas_src>
import functools
import math

import jax
import jax.numpy as jnp
from jax.experimental import pallas as pl
from jax.experimental.pallas import tpu as pltpu


def _round_up(x, m):
    return (x + m - 1) // m * m


def _pick_tm(m_out, block_m):
    """Pick (tm, m_pad): tm is a multiple of 8, tm divides m_pad, m_pad >= m_out.
    Prefers m_pad == round_up(m_out, 8) (no post-kernel row-slice copy) and, when
    there is enough work, >= 2 grid steps so v7x can shard across both TensorCores."""
    m8 = _round_up(m_out, 8)
    limit = max(8, (min(block_m, m8) // 8) * 8)
    tm = 8
    for cand in range(limit, 7, -8):          # largest multiple-of-8 divisor of m8
        if m8 % cand == 0:
            tm = cand
            break
    if tm == m8 and m8 >= 16 and m8 % 16 == 0:
        tm = m8 // 2                          # guarantee >= 2 grid steps (megacore)
    if tm * 32 < m8 and tm < 256:
        # Only awkwardly small divisors exist: accept a little row padding instead of
        # thousands of tiny grid steps (~0.35 us per-step overhead each).
        tm = max(8, (min(block_m, 512) // 8) * 8)
        return tm, _round_up(m8, tm)
    return tm, m8


def _temporal_emb_kernel(codes_ref, proj_ref, bias_ref, o_ref, *, chunk_cols):
    # codes_ref: (tm, n_codes) int32   proj_ref: (Vpad, Dpad) bf16
    # bias_ref:  (1, Dpad)  f32        o_ref:    (tm, Dpad)   out_dtype
    codes = codes_ref[...]
    col_ids = jax.lax.broadcasted_iota(jnp.int32, (1, 128), 1)      # tiny, broadcast
    acc = None
    for k, cols in enumerate(chunk_cols):                           # static V chunks
        if not cols:
            continue
        ids = col_ids + (k * 128)
        # Boolean-OR multi-hot selector: code ranges are disjoint, so OR is exact and
        # a single bf16 cast at the end replaces 2p-1 bf16 adds/casts per element.
        mask = codes[:, cols[0]:cols[0] + 1] == ids
        for c in cols[1:]:
            mask = mask | (codes[:, c:c + 1] == ids)
        part = jnp.dot(mask.astype(jnp.bfloat16),
                       proj_ref[pl.ds(k * 128, 128), :],
                       preferred_element_type=jnp.float32)          # MXU, f32 acc
        acc = part if acc is None else acc + part
    o_ref[...] = (acc + bias_ref[...]).astype(o_ref.dtype)


def temporal_embedding(x, hour_table, weekday_table, conv_w, conv_b,
                       t_patch_size, *, block_m=1024, out_dtype=jnp.float32):
    """x: (B, T, >=2) int (x[:,:,0]=weekday idx, x[:,:,1]=hour idx).
    hour_table: (hour_size, D). weekday_table: (weekday_size, D).
    conv_w: (D, D, p). conv_b: (D,).  Returns (B, T//p, D) in out_dtype."""
    B, T, _ = x.shape
    p = t_patch_size
    hour_size, d_model = hour_table.shape
    weekday_size = weekday_table.shape[0]
    t_out = T // p
    t_use = t_out * p
    m_out = B * t_out
    n_codes = 2 * p

    # --- tiny integer glue (XLA): combined code per (output row, patch pos) ---
    x = x.astype(jnp.int32)
    hour = x[:, :t_use, 1].reshape(m_out, p)
    week = x[:, :t_use, 0].reshape(m_out, p)
    j_off = jnp.arange(p, dtype=jnp.int32)
    hour_code = hour + j_off * hour_size
    week_code = p * hour_size + week + j_off * weekday_size
    codes = jnp.concatenate([hour_code, week_code], axis=-1)         # (m_out, 2p)

    # --- fold embedding tables through the patchify-conv weights (tiny) ---
    # proj[j*H + v]       = hour_table[v]    @ conv_w[:, :, j].T
    # proj[p*H + j*W + v] = weekday_table[v] @ conv_w[:, :, j].T
    hour_proj = jnp.einsum("vc,ocj->jvo", hour_table, conv_w).reshape(p * hour_size, d_model)
    week_proj = jnp.einsum("vc,ocj->jvo", weekday_table, conv_w).reshape(p * weekday_size, d_model)
    proj = jnp.concatenate([hour_proj, week_proj], axis=0)           # (Vtot, D)
    vtot = proj.shape[0]

    # --- lane-dense / MXU-friendly padding + M tiling ---
    d_pad = _round_up(d_model, 128)
    v_pad = _round_up(vtot, 128)
    tm, m_pad = _pick_tm(m_out, block_m)

    proj = jnp.pad(proj, ((0, v_pad - vtot), (0, d_pad - d_model))).astype(jnp.bfloat16)
    bias = jnp.pad(conv_b.astype(jnp.float32), (0, d_pad - d_model)).reshape(1, d_pad)
    if m_pad != m_out:
        # NOTE: padded rows get code 0 (a valid code) -> garbage rows; sliced off below.
        codes = jnp.pad(codes, ((0, m_pad - m_out), (0, 0)))

    # Static per-128-lane-chunk list of code columns whose value range intersects it,
    # so the kernel only emits compares that can possibly hit.
    code_ranges = ([(j * hour_size, (j + 1) * hour_size) for j in range(p)]
                   + [(p * hour_size + j * weekday_size,
                       p * hour_size + (j + 1) * weekday_size) for j in range(p)])
    chunk_cols = tuple(
        tuple(c for c, (lo, hi) in enumerate(code_ranges) if lo < v0 + 128 and hi > v0)
        for v0 in range(0, v_pad, 128))

    out = pl.pallas_call(
        functools.partial(_temporal_emb_kernel, chunk_cols=chunk_cols),
        out_shape=jax.ShapeDtypeStruct((m_pad, d_pad), out_dtype),
        grid_spec=pltpu.PrefetchScalarGridSpec(
            num_scalar_prefetch=0,
            grid=(m_pad // tm,),
            in_specs=[
                pl.BlockSpec((tm, n_codes), lambda i: (i, 0)),
                pl.BlockSpec((v_pad, d_pad), lambda i: (0, 0)),
                pl.BlockSpec((1, d_pad), lambda i: (0, 0)),
            ],
            out_specs=pl.BlockSpec((tm, d_pad), lambda i: (i, 0)),
        ),
        compiler_params=pltpu.CompilerParams(dimension_semantics=("parallel",)),
    )(codes, proj, bias)

    if m_pad != m_out:
        out = out[:m_out]
    if d_pad != d_model:
        # TODO(synk): if the consumer can take the d_pad-wide layout, skip this copy.
        out = out[:, :d_model]
    return out.reshape(B, t_out, d_model)


def init_params(key, d_model, t_patch_size, hour_size=48, weekday_size=7):
    """Synthetic init matching the PyTorch module's parameter shapes/distributions."""
    k1, k2, k3, k4 = jax.random.split(key, 4)
    # nn.Embedding default init: N(0, 1)
    hour_table = jax.random.normal(k1, (hour_size, d_model), jnp.float32)
    weekday_table = jax.random.normal(k2, (weekday_size, d_model), jnp.float32)
    # nn.Conv1d default init: kaiming_uniform_(a=sqrt(5)) -> U(+-1/sqrt(fan_in)); bias same
    fan_in = d_model * t_patch_size
    bound = 1.0 / math.sqrt(fan_in)
    conv_w = jax.random.uniform(k3, (d_model, d_model, t_patch_size), jnp.float32,
                                minval=-bound, maxval=bound)
    conv_b = jax.random.uniform(k4, (d_model,), jnp.float32, minval=-bound, maxval=bound)
    return hour_table, weekday_table, conv_w, conv_b


def _reference(x, hour_table, weekday_table, conv_w, conv_b, p):
    """Pure-JAX (f32) reference of the PyTorch forward."""
    hour_x = hour_table[x[:, :, 1]]
    week_x = weekday_table[x[:, :, 0]]
    emb = (hour_x + week_x).transpose(0, 2, 1)                       # (B, D, T)
    y = jax.lax.conv_general_dilated(
        emb, conv_w, window_strides=(p,), padding="VALID",
        dimension_numbers=("NCH", "OIH", "NCH"))
    y = y + conv_b.reshape(1, -1, 1)
    return y.transpose(0, 2, 1)                                      # (B, T//p, D)


if __name__ == "__main__":
    key = jax.random.PRNGKey(0)
    k_x, k_p = jax.random.split(key)

    B, T, d_model = 2, 8, 32
    hour_size, weekday_size = 48, 7

    kw, kh = jax.random.split(k_x)
    weekday_idx = jax.random.randint(kw, (B, T), 0, weekday_size)
    hour_idx = jax.random.randint(kh, (B, T), 0, hour_size)
    x = jnp.stack([weekday_idx, hour_idx], axis=-1).astype(jnp.int32)  # (B, T, 2)

    # p=1 is the module default; p=2 patchified; p=4 exercises the multi-V-chunk path.
    for p in (1, 2, 4):
        params = init_params(jax.random.fold_in(k_p, p), d_model, p, hour_size, weekday_size)
        out = jax.block_until_ready(temporal_embedding(x, *params, p))
        ref = _reference(x, *params, p)
        assert out.shape == (B, T // p, d_model), out.shape
        # bf16 MXU inputs (f32 accumulation) -> loosened tolerance vs the pure-f32 ref.
        err = float(jnp.max(jnp.abs(out - ref)))
        assert jnp.allclose(out, ref, atol=2e-2, rtol=2e-2), f"p={p} mismatch, max|diff|={err}"

    # bf16 output path (recommended on v5e/v6e when the consumer computes in bf16).
    p = 2
    params = init_params(jax.random.fold_in(k_p, p), d_model, p, hour_size, weekday_size)
    out_bf = jax.block_until_ready(
        temporal_embedding(x, *params, p, out_dtype=jnp.bfloat16))
    ref = _reference(x, *params, p)
    assert out_bf.dtype == jnp.bfloat16 and out_bf.shape == (B, T // p, d_model)
    err = float(jnp.max(jnp.abs(out_bf.astype(jnp.float32) - ref)))
    assert err < 4e-2, f"bf16-out mismatch, max|diff|={err}"

    print("KERNEL_OK")
</pallas_src>

<mosaic_0001>
module attributes {stable_mosaic.version = 11 : i64} {
  func.func @_temporal_emb_kernel(%arg0: i32, %arg1: memref<8x2xi32, #tpu.memory_space<vmem>>, %arg2: memref<128x128xbf16, #tpu.memory_space<vmem>>, %arg3: memref<1x128xf32, #tpu.memory_space<vmem>>, %arg4: memref<8x128xf32, #tpu.memory_space<vmem>>) attributes {dimension_semantics = [#tpu.dimension_semantics<parallel>], iteration_bounds = array<i64: 2>, scalar_prefetch = 0 : i64, scratch_operands = 0 : i64, tpu.core_type = #tpu.core_type<tc>, window_params = [{transform_indices = @transform_0, window_bounds = array<i64: 8, 2>}, {pipeline_mode = #tpu.pipeline_mode<synchronous>, transform_indices = @transform_1, window_bounds = array<i64: 128, 128>}, {pipeline_mode = #tpu.pipeline_mode<synchronous>, transform_indices = @transform_2, window_bounds = array<i64: 1, 128>}, {transform_indices = @transform_3, window_bounds = array<i64: 8, 128>}]} {
    %c0 = arith.constant 0 : index
    %c0_0 = arith.constant 0 : index
    %0 = vector.load %arg1[%c0, %c0_0] : memref<8x2xi32, #tpu.memory_space<vmem>>, vector<8x2xi32>
    %1 = tpu.iota {dimensions = array<i32: 1>} : vector<1x128xi32>
    %c0_i32 = arith.constant 0 : i32
    %2 = vector.broadcast %c0_i32 : i32 to vector<1x128xi32>
    %3 = arith.addi %1, %2 : vector<1x128xi32>
    %4 = vector.extract_strided_slice %0 {offsets = [0, 0], sizes = [8, 1], strides = [1, 1]} : vector<8x2xi32> to vector<8x1xi32>
    %5 = vector.broadcast %4 : vector<8x1xi32> to vector<8x128xi32>
    %6 = vector.broadcast %3 : vector<1x128xi32> to vector<8x128xi32>
    %7 = arith.cmpi eq, %5, %6 : vector<8x128xi32>
    %8 = vector.extract_strided_slice %0 {offsets = [0, 1], sizes = [8, 1], strides = [1, 1]} : vector<8x2xi32> to vector<8x1xi32>
    %9 = vector.broadcast %8 : vector<8x1xi32> to vector<8x128xi32>
    %10 = vector.broadcast %3 : vector<1x128xi32> to vector<8x128xi32>
    %11 = arith.cmpi eq, %9, %10 : vector<8x128xi32>
    %12 = arith.ori %7, %11 : vector<8x128xi1>
    %13 = arith.extui %12 : vector<8x128xi1> to vector<8x128xi32>
    %14 = arith.sitofp %13 : vector<8x128xi32> to vector<8x128xf32>
    %15 = arith.truncf %14 : vector<8x128xf32> to vector<8x128xbf16>
    %c0_1 = arith.constant 0 : index
    %c0_2 = arith.constant 0 : index
    %16 = vector.load %arg2[%c0_1, %c0_2] : memref<128x128xbf16, #tpu.memory_space<vmem>>, vector<128x128xbf16>
    %cst = arith.constant dense<0.000000e+00> : vector<8x128xf32>
    %17 = tpu.matmul %15, %16, %cst {dimension_numbers = #tpu.dot_dimension_numbers<[1], [0], [0], [1], [0, 0, 1, 1], [], []>} : vector<8x128xbf16>, vector<128x128xbf16>, vector<8x128xf32> -> vector<8x128xf32>
    %c0_3 = arith.constant 0 : index
    %c0_4 = arith.constant 0 : index
    %18 = vector.load %arg3[%c0_3, %c0_4] : memref<1x128xf32, #tpu.memory_space<vmem>>, vector<1x128xf32>
    %19 = vector.broadcast %18 : vector<1x128xf32> to vector<8x128xf32>
    %20 = arith.addf %17, %19 : vector<8x128xf32>
    %c0_5 = arith.constant 0 : index
    %c0_6 = arith.constant 0 : index
    %21 = vector.load %arg4[%c0_5, %c0_6] : memref<8x128xf32, #tpu.memory_space<vmem>>, vector<8x128xf32>
    tpu.vector_store %arg4[%c0_5, %c0_6], %20 {strides = array<i32>} : memref<8x128xf32, #tpu.memory_space<vmem>>, vector<8x128xf32>,
    return
  }
  func.func @transform_0(%arg0: i32) -> (i32, i32) {
    %c0_i32 = arith.constant 0 : i32
    %c0_i32_0 = arith.constant 0 : i32
    return %arg0, %c0_i32 : i32, i32
  }
  func.func @transform_1(%arg0: i32) -> (i32, i32) {
    %c0_i32 = arith.constant 0 : i32
    %c0_i32_0 = arith.constant 0 : i32
    %c0_i32_1 = arith.constant 0 : i32
    return %c0_i32, %c0_i32_0 : i32, i32
  }
  func.func @transform_2(%arg0: i32) -> (i32, i32) {
    %c0_i32 = arith.constant 0 : i32
    %c0_i32_0 = arith.constant 0 : i32
    %c0_i32_1 = arith.constant 0 : i32
    return %c0_i32, %c0_i32_0 : i32, i32
  }
  func.func @transform_3(%arg0: i32) -> (i32, i32) {
    %c0_i32 = arith.constant 0 : i32
    %c0_i32_0 = arith.constant 0 : i32
    return %arg0, %c0_i32 : i32, i32
  }
}

</mosaic_0001>

<llo_original>
// kernel: tpu_custom_call.1
$region0: #{tpu_custom_call.1}
  #allocation0 [shape = 'u32[]', space=smem, size = 0x4, offset = 0x4, fixed_abs, tag = 'smem constant byte address 0x4 - core index']
  #allocation1 [shape = 'u32[72,128]{1,0:T(1,128)}', space=vmem, size = 0x9000, scoped, tag = 'internal scratch']
  %s0 = inlined_call_operand.vmem [shape: s32[16,2], index: 0, kind: input, shape index: {}]
  %s1 = inlined_call_operand.hbm [shape: bf16[128,128], index: 1, kind: input, shape index: {}]
  %s2 = inlined_call_operand.vmem [shape: f32[1,128], index: 2, kind: input, shape index: {}]
  %s3 = inlined_call_operand.hbm [shape: f32[16,128], index: 3, kind: output, shape index: {}]
  %s4 = sld [smem:[#allocation0]]
  $region49: #{tpu_custom_call.1} parent=0
    _
  %s6 = ssub.s32 1, %s4
  %s7 = scalar_select 0, %s6, %s4
  $region1: #{tpu_custom_call.1} parent=0
    #allocation2 [shape = 'u8[32768]{0}', space=vmem, size = 0x8000, scoped, tag = 'input window, operand 1, single buffered']
    #allocation3 [shape = 's32[2]{0}', space=sflag, size = 0x8, scoped, tag = 'scoped memory for tpu_custom_call.1']
    #allocation4 [shape = 's32[2]{0}', space=sflag, size = 0x8, scoped, tag = 'scoped memory for tpu_custom_call.1']
    #allocation5 [shape = 'u8[8192]{0}', space=vmem, size = 0x2000, scoped, tag = 'output window, operand 0']
    %8 = vsyncpa [#allocation3], 0
    %9 = vsyncpa [#allocation4], 0
    %s10 = scalar_lea.sflag [#allocation4], 1
    %11 = vsyncpa %s10, 0
    loop: start=0, step=1, limit=4
    $region2: #{tpu_custom_call.1} parent=1 // loop_pre_header
      _
    $region3: #{tpu_custom_call.1} parent=1 // loop_header
      %s13 = sphi 0, %s17
      %p14 = scmp.ge.s32.totalorder %s13, 4
      %s23 = sphi 0, %s25
      %s26 = sphi 0, %s23
      %s27 = sphi 0, %s26
      %s43 = sphi 0, %s27
      %s47 = sphi 0, %s47
      %s49 = sphi 0, %s47
      %s50 = sphi 0, %s49
      %s64 = sphi 0, %s50
      %s68 = sphi 0, %s68
      %s70 = sphi 0, %s68
      %s71 = sphi 0, %s70
      %s85 = sphi 0, %s71
      %s91 = sphi 0, %s93
      %s94 = sphi 0, %s91
      %s95 = sphi 0, %s94
      %s111 = sphi 0, %s95
    $region4: #{tpu_custom_call.1} parent=1 // loop_header_branch
      %16 = sbr.rel (%p14) target = $region8
    $region5: #{tpu_custom_call.1} parent=1 // loop_body
      %s18 = ssub.s32 %s13, 1
      %s19 = ssub.s32 %s13, 2
      %s20 = sadd.s32 %s13, 1
      %s21 = ssub.s32 %s13, %s20
      %p22 = scmp.eq.s32.totalorder %s21, 0
      %s24 = sadd.s32 %s23, 1
      %s25 = scalar_select %p22, %s23, %s24
      %p28 = pneg %p22
      %p29 = scmp.eq.s32.totalorder %s13, 1
      %p30 = por %p28, %p29
      %p31 = scmp.ne.s32.totalorder %s23, %s26
      %p32 = scmp.eq.s32.totalorder %s13, 0
      %p33 = por %p31, %p32
      %p34 = scmp.ne.s32.totalorder %s23, %s26
      %p35 = scmp.eq.s32.totalorder %s18, 1
      %p36 = por %p34, %p35
      %p37 = scmp.ne.s32.totalorder %s26, %s27
      %p38 = scmp.eq.s32.totalorder %s18, 0
      %p39 = por %p37, %p38
      %p40 = scmp.ne.s32.totalorder %s26, %s27
      %p41 = scmp.eq.s32.totalorder %s19, 1
      %p42 = por %p40, %p41
      %p44 = scmp.ne.s32.totalorder %s27, %s43
      %p45 = scmp.eq.s32.totalorder %s19, 0
      %p46 = por %p44, %p45
      %s48 = sadd.s32 %s47, 1
      %p51 = scmp.eq.s32.totalorder %s13, 1
      %p52 = scmp.ne.s32.totalorder %s47, %s49
      %p53 = scmp.eq.s32.totalorder %s13, 0
      %p54 = por %p52, %p53
      %p55 = scmp.ne.s32.totalorder %s47, %s49
      %p56 = scmp.eq.s32.totalorder %s18, 1
      %p57 = por %p55, %p56
      %p58 = scmp.ne.s32.totalorder %s49, %s50
      %p59 = scmp.eq.s32.totalorder %s18, 0
      %p60 = por %p58, %p59
      %p61 = scmp.ne.s32.totalorder %s49, %s50
      %p62 = scmp.eq.s32.totalorder %s19, 1
      %p63 = por %p61, %p62
      %p65 = scmp.ne.s32.totalorder %s50, %s64
      %p66 = scmp.eq.s32.totalorder %s19, 0
      %p67 = por %p65, %p66
      %s69 = sadd.s32 %s68, 1
      %p72 = scmp.eq.s32.totalorder %s13, 1
      %p73 = scmp.ne.s32.totalorder %s68, %s70
      %p74 = scmp.eq.s32.totalorder %s13, 0
      %p75 = por %p73, %p74
      %p76 = scmp.ne.s32.totalorder %s68, %s70
      %p77 = scmp.eq.s32.totalorder %s18, 1
      %p78 = por %p76, %p77
      %p79 = scmp.ne.s32.totalorder %s70, %s71
      %p80 = scmp.eq.s32.totalorder %s18, 0
      %p81 = por %p79, %p80
      %p82 = scmp.ne.s32.totalorder %s70, %s71
      %p83 = scmp.eq.s32.totalorder %s19, 1
      %p84 = por %p82, %p83
      %p86 = scmp.ne.s32.totalorder %s71, %s85
      %p87 = scmp.eq.s32.totalorder %s19, 0
      %p88 = por %p86, %p87
      %s89 = ssub.s32 %s13, %s20
      %p90 = scmp.eq.s32.totalorder %s89, 0
      %s92 = sadd.s32 %s91, 1
      %s93 = scalar_select %p90, %s91, %s92
      %p96 = pneg %p90
      %p97 = scmp.eq.s32.totalorder %s13, 1
      %p98 = por %p96, %p97
      %p99 = scmp.ne.s32.totalorder %s91, %s94
      %p100 = scmp.eq.s32.totalorder %s13, 0
      %p101 = por %p99, %p100
      %p102 = scmp.ne.s32.totalorder %s91, %s94
      %p103 = scmp.eq.s32.totalorder %s18, 1
      %p104 = por %p102, %p103
      %p105 = scmp.ne.s32.totalorder %s94, %s95
      %p106 = scmp.eq.s32.totalorder %s18, 0
      %p107 = por %p105, %p106
      %p108 = scmp.ne.s32.totalorder %s94, %s95
      %p109 = scmp.eq.s32.totalorder %s19, 1
      %p110 = por %p108, %p109
      %p112 = scmp.ne.s32.totalorder %s95, %s111
      %p113 = scmp.eq.s32.totalorder %s19, 0
      %p114 = por %p112, %p113
      %p115 = scmp.le.s32.totalorder 1, %s13
      %p116 = scmp.lt.s32.totalorder %s13, 3
      %p117 = pnand %p115, %p116
      %p118 = pneg %p117
      // Predicated region
      $region9: #{tpu_custom_call.1} parent=5 // pred_check
        _
      $region10: #{tpu_custom_call.1} parent=5 // pred_check_branch
        %120 = sbr.rel (%p117) target = $region12
      $region11: #{tpu_custom_call.1} parent=5 // pred_region
        %s121 = ssub.s32 %s13, 1
        // Predicated region
        $region13: #{tpu_custom_call.1} parent=11 // pred_check
          %p122 = pneg %p60
        $region14: #{tpu_custom_call.1} parent=11 // pred_check_branch
          %124 = sbr.rel (%p122) target = $region16
        $region15: #{tpu_custom_call.1} parent=11 // pred_region
          %126 = vsyncadd [#allocation3], 0
          %s127 = sshll.u32 %s1, 4
          %s128 = int_to_ptr.hbm [resolvable:$true] %s127
          %s129 = sshll.u32 [#allocation2], 4
          %s130 = int_to_ptr.vmem [resolvable:$true] %s129
          %135 = dma.hbm_to_vmem [thread:$0]  %s128, 1024, %s130, [#allocation3], 64, 64, 4
        $region16: #{tpu_custom_call.1} parent=11 // pred_fallthru
          _
        // Predicated region
        $region17: #{tpu_custom_call.1} parent=11 // pred_check
          %p136 = pneg %p81
        $region18: #{tpu_custom_call.1} parent=11 // pred_check_branch
          %138 = sbr.rel (%p136) target = $region20
        $region19: #{tpu_custom_call.1} parent=11 // pred_region
          _
        $region20: #{tpu_custom_call.1} parent=11 // pred_fallthru
          _
      $region12: #{tpu_custom_call.1} parent=5 // pred_fallthru
        _
      %p139 = scmp.lt.s32.totalorder %s13, 2
      // Predicated region
      $region21: #{tpu_custom_call.1} parent=5 // pred_check
        %p140 = pneg %p139
      $region22: #{tpu_custom_call.1} parent=5 // pred_check_branch
        %142 = sbr.rel (%p140) target = $region24
      $region23: #{tpu_custom_call.1} parent=5 // pred_region
        // Predicated region
        $region25: #{tpu_custom_call.1} parent=23 // pred_check
          %p143 = pneg %p33
        $region26: #{tpu_custom_call.1} parent=23 // pred_check_branch
          %145 = sbr.rel (%p143) target = $region28
        $region27: #{tpu_custom_call.1} parent=23 // pred_region
          %p146 = scmp.lt.s32.totalorder %s13, 1
          %s147 = scalar_select %p146, %s13, 1
          %s148 = smul.addr %s147, 8
          %s149 = scalar_lea.vmem %s0, %s148
        $region28: #{tpu_custom_call.1} parent=23 // pred_fallthru
          _
      $region24: #{tpu_custom_call.1} parent=5 // pred_fallthru
        _
      %p150 = scmp.le.s32.totalorder 1, %s13
      %p151 = scmp.lt.s32.totalorder %s13, 3
      %p152 = pnand %p150, %p151
      %p153 = pneg %p152
      // Predicated region
      $region29: #{tpu_custom_call.1} parent=5 // pred_check
        _
      $region30: #{tpu_custom_call.1} parent=5 // pred_check_branch
        %155 = sbr.rel (%p152) target = $region32
      $region31: #{tpu_custom_call.1} parent=5 // pred_region
        %s156 = ssub.s32 %s13, 1
        // Predicated region
        $region33: #{tpu_custom_call.1} parent=31 // pred_check
          %p157 = pneg %p60
        $region34: #{tpu_custom_call.1} parent=31 // pred_check_branch
          %159 = sbr.rel (%p157) target = $region36
        $region35: #{tpu_custom_call.1} parent=31 // pred_region
          %161 = dma.done [#allocation3], 1024
        $region36: #{tpu_custom_call.1} parent=31 // pred_fallthru
          _
        %p162 = scmp.lt.s32.totalorder %s18, 1
        %s163 = scalar_select %p162, %s18, 1
        %s164 = smul.addr %s163, 8
        %s165 = scalar_lea.vmem %s0, %s164
        %p166 = pneg %p39
        %p167 = pneg %p36
        %p168 = pneg %p60
        %p169 = pneg %p57
        %p170 = pneg %p81
        %p171 = pneg %p78
        %p172 = pneg %p107
        %p173 = pneg %p104
        %s174 = sand.u32 %s94, 1
        %s175 = scalar_lea.sflag [#allocation4], %s174
        %s176 = sand.u32 %s94, 1
        %s177 = smul.addr %s176, 8
        %s178 = scalar_lea.vmem [#allocation5], %s177
        %p179 = scmp.lt.s32.totalorder %s18, 1
        %s180 = scalar_select %p179, %s18, 1
        %s181 = smul.addr %s180, 8
        %s182 = scalar_lea.vmem %s0, %s181
        %v183 = vld [vmem:[%s182] sm:$0xff]
        %v184 = vlaneseq
        %v185 = vand.u32 %v184, 127
        %186 = vset.pattern.permute.xlu0 0
        %187 = vperm.xlu0 %186, %v183
        %v188 = vpop.permute.xlu0 %187
        %vm189 = vcmp.eq.s32.totalorder %v188, %v185
        %190 = vset.pattern.permute.xlu0 1
        %191 = vperm.xlu0 %190, %v183
        %v192 = vpop.permute.xlu0 %191
        %vm193 = vcmp.eq.s32.totalorder %v192, %v185
        %vm194 = vmor %vm189, %vm193
        %v195 = vsel %vm194, 1, 0
        %v196 = vcvt.s32.f32 %v195
        %v197 = vpack.c.bf16 %v196, %v196
        %v198 = vld [vmem:[#allocation2] sm:$0xf]
        %v199 = vld [vmem:[#allocation2 + $0x4] sm:$0xf]
        %v200 = vld [vmem:[#allocation2 + $0x8] sm:$0xf]
        %v201 = vld [vmem:[#allocation2 + $0xc] sm:$0xf]
        %v202 = vld [vmem:[#allocation2 + $0x10] sm:$0xf]
        %v203 = vld [vmem:[#allocation2 + $0x14] sm:$0xf]
        %v204 = vld [vmem:[#allocation2 + $0x18] sm:$0xf]
        %v205 = vld [vmem:[#allocation2 + $0x1c] sm:$0xf]
        %v206 = vld [vmem:[#allocation2 + $0x20] sm:$0xf]
        %v207 = vld [vmem:[#allocation2 + $0x24] sm:$0xf]
        %v208 = vld [vmem:[#allocation2 + $0x28] sm:$0xf]
        %v209 = vld [vmem:[#allocation2 + $0x2c] sm:$0xf]
        %v210 = vld [vmem:[#allocation2 + $0x30] sm:$0xf]
        %v211 = vld [vmem:[#allocation2 + $0x34] sm:$0xf]
        %v212 = vld [vmem:[#allocation2 + $0x38] sm:$0xf]
        %v213 = vld [vmem:[#allocation2 + $0x3c] sm:$0xf]
        %v214 = vld [vmem:[%s2] sm:$0x1]
        %v216 = vperm.slane %v214, 0
        %v234 = vunpack.c.l.b16 %v198
        %v235 = vunpack.c.l.b16 %v199
        %v236 = vunpack.c.l.b16 %v200
        %v237 = vunpack.c.l.b16 %v201
        %v238 = vunpack.c.l.b16 %v202
        %v239 = vunpack.c.l.b16 %v203
        %v240 = vunpack.c.l.b16 %v204
        %v241 = vunpack.c.l.b16 %v205
        %v242 = vunpack.c.l.b16 %v206
        %v243 = vunpack.c.l.b16 %v207
        %v244 = vunpack.c.l.b16 %v208
        %v245 = vunpack.c.l.b16 %v209
        %v246 = vunpack.c.l.b16 %v210
        %v247 = vunpack.c.l.b16 %v211
        %v248 = vunpack.c.l.b16 %v212
        %v249 = vunpack.c.l.b16 %v213
        %v250 = vpack.c.b16 %v235, %v234
        %v251 = vpack.c.b16 %v237, %v236
        %v252 = vpack.c.b16 %v239, %v238
        %v253 = vpack.c.b16 %v241, %v240
        %v254 = vpack.c.b16 %v243, %v242
        %v255 = vpack.c.b16 %v245, %v244
        %v256 = vpack.c.b16 %v247, %v246
        %v257 = vpack.c.b16 %v249, %v248
        %266 = vmatpush.bf16.msra.mxu0 %v257
        %267 = vmatpush.bf16.msra.mxu0 %v256
        %268 = vmatpush.bf16.msra.mxu0 %v255
        %269 = vmatpush.bf16.msra.mxu0 %v254
        %270 = vmatpush.bf16.msra.mxu0 %v253
        %271 = vmatpush.bf16.msra.mxu0 %v252
        %272 = vmatpush.bf16.msra.mxu0 %v251
        %273 = vmatpush.bf16.msra.mxu0 %v250
        %274 = vmatmul.bf16.gmra.mxu0 %v197
        %v275 = vpop.f32.mrf.mxu0
        %v276 = vadd.f32 %v216, %v275
        %v277 = vpop.f32.mrf.mxu0
        %278 = vdwg.mxu0
        %279 = vst [vmem:[%s178] sm:$0xff] %v276
        %s280 = sand.u32 %s94, 1
        %s281 = scalar_lea.sflag [#allocation4], %s280
        %s282 = sand.u32 %s94, 1
        %s283 = smul.addr %s282, 8
        %s284 = scalar_lea.vmem [#allocation5], %s283
        // Predicated region
        $region37: #{tpu_custom_call.1} parent=31 // pred_check
          %p285 = pneg %p104
        $region38: #{tpu_custom_call.1} parent=31 // pred_check_branch
          %287 = sbr.rel (%p285) target = $region40
        $region39: #{tpu_custom_call.1} parent=31 // pred_region
          %289 = vsyncadd %s281, 0
          %s290 = smul.addr %s18, 8
          %s291 = scalar_lea.hbm %s3, %s290
          %s293 = sshll.u32 %s284, 4
          %s294 = int_to_ptr.vmem [resolvable:$true] %s293
          %s295 = sshll.u32 %s291, 4
          %s296 = int_to_ptr.hbm [resolvable:$true] %s295
          %298 = dma.vmem_to_hbm [thread:$0]  %s294, 128, %s296, %s281
        $region40: #{tpu_custom_call.1} parent=31 // pred_fallthru
          _
      $region32: #{tpu_custom_call.1} parent=5 // pred_fallthru
        _
      %p299 = scmp.le.s32.totalorder 2, %s13
      // Predicated region
      $region41: #{tpu_custom_call.1} parent=5 // pred_check
        %p300 = pneg %p299
      $region42: #{tpu_custom_call.1} parent=5 // pred_check_branch
        %302 = sbr.rel (%p300) target = $region44
      $region43: #{tpu_custom_call.1} parent=5 // pred_region
        %s303 = ssub.s32 %s13, 2
        // Predicated region
        $region45: #{tpu_custom_call.1} parent=43 // pred_check
          %p304 = pneg %p110
        $region46: #{tpu_custom_call.1} parent=43 // pred_check_branch
          %306 = sbr.rel (%p304) target = $region48
        $region47: #{tpu_custom_call.1} parent=43 // pred_region
          %s307 = sand.u32 %s95, 1
          %s308 = scalar_lea.sflag [#allocation4], %s307
          %s309 = sand.u32 %s95, 1
          %s310 = smul.addr %s309, 8
          %s311 = scalar_lea.vmem [#allocation5], %s310
          %313 = dma.done %s308, 128
        $region48: #{tpu_custom_call.1} parent=43 // pred_fallthru
          _
      $region44: #{tpu_custom_call.1} parent=5 // pred_fallthru
        _
    $region6: #{tpu_custom_call.1} parent=1 // loop_footer
      %s17 = sadd.s32 1, %s13
    $region7: #{tpu_custom_call.1} parent=1 // loop_footer_branch
      %12 = sbr.rel target = $region3
    $region8: #{tpu_custom_call.1} parent=1 // loop_exit
      _
    %314 = vsyncpa [#allocation3], 1
    %s315 = scalar_lea.sflag [#allocation3], 1
    %316 = vsyncpa %s315, 1
    %317 = vsyncpa [#allocation4], 1
    %s318 = scalar_lea.sflag [#allocation4], 1
    %319 = vsyncpa %s318, 1

</llo_original>
